<compile_context>
chip_gen: v6e
topology: v6e:2x2x1
jax: 0.10.0
libtpu: 0.0.40
codegen_flags: <defaults>
</compile_context>

<pallas_src>
import jax
import jax.numpy as jnp
from jax.experimental import pallas as pl
from jax.experimental.pallas import tpu as pltpu


def _round_up(x, m):
    return (x + m - 1) // m * m


def _make_residual_kernel(c_out, c_in, use_mxu):
    """Kernel computing o = W @ x + b + x for one (C, TS) lane-dense tile."""

    def kernel(x_ref, w_ref, b_ref, o_ref):
        # x_ref: (C_in, TS)    spatial axis in the lane dimension
        # w_ref: (C_out, C_in) resident weight block
        # b_ref: (C_out, 1)    resident bias block
        # o_ref: (C_out, TS)
        x = x_ref[...].astype(jnp.float32)
        b = b_ref[...].astype(jnp.float32)

        if use_mxu:
            # Larger C: MXU matmul in the orientation that contracts w's last
            # dim against x's first dim (no transpose needed), f32 accumulate.
            y = jnp.dot(w_ref[...], x_ref[...],
                        preferred_element_type=jnp.float32)
            acc = y + b + x
        else:
            # Tiny C: unrolled lane-dense VPU multiply-add chain; fused with
            # bias + residual.  Compute is free filler under the HBM bound.
            w = w_ref[...].astype(jnp.float32)
            acc = x + b  # residual + bias (C_out == C_in)
            for i in range(c_in):
                # (C_out,1) * (1,TS) broadcast -> (C_out,TS)
                acc = acc + w[:, i:i + 1] * x[i:i + 1, :]

        o_ref[...] = acc.astype(o_ref.dtype)

    return kernel


def residual_pointwise_conv(x_nchw, weight, bias, *, spatial_tile=None,
                            vmem_budget_bytes=8 * 1024 * 1024):
    """Residual(1x1 Conv2d)(x): x NCHW, weight (C_out, C_in), bias (C_out,)."""
    n, c, h, w = x_nchw.shape
    c_out, c_in = weight.shape
    assert c == c_in and c_out == c_in, "residual add requires C_out == C_in"

    hw = h * w
    dtype_bytes = jnp.dtype(x_nchw.dtype).itemsize

    # Keep channels in the sublane dim, spatial in the lane dim (lane-dense
    # output); this is a pure reshape, no transpose / extra HBM traffic.
    x_rows = x_nchw.reshape(n, c, hw)

    # Tile selection:
    #   * target ~1 MiB per input block (amortize per-step overhead),
    #   * stay within the VMEM budget for double-buffered in + out blocks,
    #   * multiple of 128 lanes, clamped to the (128-rounded) spatial extent.
    if spatial_tile is None:
        row_bytes = max(1, c * dtype_bytes)
        ts_budget = vmem_budget_bytes // (4 * row_bytes)   # 2 bufs x (in+out)
        ts_target = (1 << 20) // row_bytes                  # ~1 MiB in-block
        ts = min(ts_budget, ts_target)
        ts = max(128, (ts // 128) * 128)
        ts = min(ts, _round_up(hw, 128))
    else:
        ts = spatial_tile

    hw_padded = _round_up(hw, ts)
    if hw_padded != hw:
        x_rows = jnp.pad(x_rows, ((0, 0), (0, 0), (0, hw_padded - hw)))

    bias_col = bias.reshape(c_out, 1)
    grid = (n, hw_padded // ts)

    kernel = _make_residual_kernel(c_out, c_in, use_mxu=(c_in >= 32))

    out_rows = pl.pallas_call(
        kernel,
        out_shape=jax.ShapeDtypeStruct((n, c_out, hw_padded), x_nchw.dtype),
        grid_spec=pltpu.PrefetchScalarGridSpec(
            num_scalar_prefetch=0,
            grid=grid,
            in_specs=[
                # x: one sample, full channel extent, spatial tile in lanes
                pl.BlockSpec((None, c_in, ts), lambda b, s: (b, 0, s)),
                # resident weight / bias blocks (same block every grid step,
                # so they are not re-fetched)
                pl.BlockSpec((c_out, c_in), lambda b, s: (0, 0)),
                pl.BlockSpec((c_out, 1), lambda b, s: (0, 0)),
            ],
            out_specs=pl.BlockSpec((None, c_out, ts), lambda b, s: (b, 0, s)),
        ),
        compiler_params=pltpu.CompilerParams(
            dimension_semantics=("parallel", "parallel"),
        ),
    )(x_rows, weight, bias_col)

    return out_rows[:, :, :hw].reshape(n, c_out, h, w)


if __name__ == "__main__":
    key = jax.random.PRNGKey(0)
    kx, kw, kb = jax.random.split(key, 3)

    N, C, H, W = 2, 4, 16, 16
    x = jax.random.normal(kx, (N, C, H, W), dtype=jnp.float32)
    # Deterministic synthetic Conv2d(4, 4, kernel_size=1) parameters.
    weight = jax.random.normal(kw, (C, C), dtype=jnp.float32) * 0.1
    bias = jax.random.normal(kb, (C,), dtype=jnp.float32) * 0.1

    out = jax.block_until_ready(residual_pointwise_conv(x, weight, bias))

    # Pure-JAX reference: fn(x) + x with fn = 1x1 conv over channels (NCHW).
    ref = jnp.einsum("oc,nchw->nohw", weight, x) + bias[None, :, None, None] + x
    assert out.shape == x.shape and out.dtype == x.dtype
    assert jnp.allclose(out, ref, atol=1e-5, rtol=1e-5)

    print("KERNEL_OK")
</pallas_src>

<mosaic_0001>
module attributes {stable_mosaic.version = 11 : i64} {
  func.func @kernel(%arg0: i32, %arg1: i32, %arg2: memref<1x4x256xf32, #tpu.memory_space<vmem>>, %arg3: memref<4x4xf32, #tpu.memory_space<vmem>>, %arg4: memref<4x1xf32, #tpu.memory_space<vmem>>, %arg5: memref<1x4x256xf32, #tpu.memory_space<vmem>>) attributes {dimension_semantics = [#tpu.dimension_semantics<parallel>, #tpu.dimension_semantics<parallel>], iteration_bounds = array<i64: 2, 1>, scalar_prefetch = 0 : i64, scratch_operands = 0 : i64, tpu.core_type = #tpu.core_type<tc>, window_params = [{transform_indices = @transform_0, window_bounds = array<i64: 1, 4, 256>}, {pipeline_mode = #tpu.pipeline_mode<synchronous>, transform_indices = @transform_1, window_bounds = array<i64: 4, 4>}, {pipeline_mode = #tpu.pipeline_mode<synchronous>, transform_indices = @transform_2, window_bounds = array<i64: 4, 1>}, {transform_indices = @transform_3, window_bounds = array<i64: 1, 4, 256>}]} {
    %c0 = arith.constant 0 : index
    %c0_0 = arith.constant 0 : index
    %c0_1 = arith.constant 0 : index
    %0 = vector.load %arg2[%c0, %c0_0, %c0_1] : memref<1x4x256xf32, #tpu.memory_space<vmem>>, vector<1x4x256xf32>
    %1 = vector.shape_cast %0 : vector<1x4x256xf32> to vector<4x256xf32>
    %c0_2 = arith.constant 0 : index
    %c0_3 = arith.constant 0 : index
    %2 = vector.load %arg4[%c0_2, %c0_3] : memref<4x1xf32, #tpu.memory_space<vmem>>, vector<4x1xf32>
    %c0_4 = arith.constant 0 : index
    %c0_5 = arith.constant 0 : index
    %3 = vector.load %arg3[%c0_4, %c0_5] : memref<4x4xf32, #tpu.memory_space<vmem>>, vector<4x4xf32>
    %4 = vector.broadcast %2 : vector<4x1xf32> to vector<4x256xf32>
    %5 = arith.addf %1, %4 : vector<4x256xf32>
    %6 = vector.extract_strided_slice %3 {offsets = [0, 0], sizes = [4, 1], strides = [1, 1]} : vector<4x4xf32> to vector<4x1xf32>
    %7 = vector.extract_strided_slice %1 {offsets = [0, 0], sizes = [1, 256], strides = [1, 1]} : vector<4x256xf32> to vector<1x256xf32>
    %8 = vector.broadcast %6 : vector<4x1xf32> to vector<4x256xf32>
    %9 = vector.broadcast %7 : vector<1x256xf32> to vector<4x256xf32>
    %10 = arith.mulf %8, %9 : vector<4x256xf32>
    %11 = arith.addf %5, %10 : vector<4x256xf32>
    %12 = vector.extract_strided_slice %3 {offsets = [0, 1], sizes = [4, 1], strides = [1, 1]} : vector<4x4xf32> to vector<4x1xf32>
    %13 = vector.extract_strided_slice %1 {offsets = [1, 0], sizes = [1, 256], strides = [1, 1]} : vector<4x256xf32> to vector<1x256xf32>
    %14 = vector.broadcast %12 : vector<4x1xf32> to vector<4x256xf32>
    %15 = vector.broadcast %13 : vector<1x256xf32> to vector<4x256xf32>
    %16 = arith.mulf %14, %15 : vector<4x256xf32>
    %17 = arith.addf %11, %16 : vector<4x256xf32>
    %18 = vector.extract_strided_slice %3 {offsets = [0, 2], sizes = [4, 1], strides = [1, 1]} : vector<4x4xf32> to vector<4x1xf32>
    %19 = vector.extract_strided_slice %1 {offsets = [2, 0], sizes = [1, 256], strides = [1, 1]} : vector<4x256xf32> to vector<1x256xf32>
    %20 = vector.broadcast %18 : vector<4x1xf32> to vector<4x256xf32>
    %21 = vector.broadcast %19 : vector<1x256xf32> to vector<4x256xf32>
    %22 = arith.mulf %20, %21 : vector<4x256xf32>
    %23 = arith.addf %17, %22 : vector<4x256xf32>
    %24 = vector.extract_strided_slice %3 {offsets = [0, 3], sizes = [4, 1], strides = [1, 1]} : vector<4x4xf32> to vector<4x1xf32>
    %25 = vector.extract_strided_slice %1 {offsets = [3, 0], sizes = [1, 256], strides = [1, 1]} : vector<4x256xf32> to vector<1x256xf32>
    %26 = vector.broadcast %24 : vector<4x1xf32> to vector<4x256xf32>
    %27 = vector.broadcast %25 : vector<1x256xf32> to vector<4x256xf32>
    %28 = arith.mulf %26, %27 : vector<4x256xf32>
    %29 = arith.addf %23, %28 : vector<4x256xf32>
    %c0_6 = arith.constant 0 : index
    %c0_7 = arith.constant 0 : index
    %c0_8 = arith.constant 0 : index
    %30 = vector.load %arg5[%c0_6, %c0_7, %c0_8] : memref<1x4x256xf32, #tpu.memory_space<vmem>>, vector<1x4x256xf32>
    %31 = vector.shape_cast %30 : vector<1x4x256xf32> to vector<4x256xf32>
    %32 = vector.shape_cast %29 : vector<4x256xf32> to vector<1x4x256xf32>
    tpu.vector_store %arg5[%c0_6, %c0_7, %c0_8], %32 {strides = array<i32>} : memref<1x4x256xf32, #tpu.memory_space<vmem>>, vector<1x4x256xf32>,
    return
  }
  func.func @transform_0(%arg0: i32, %arg1: i32) -> (i32, i32, i32) {
    %c0_i32 = arith.constant 0 : i32
    %c0_i32_0 = arith.constant 0 : i32
    return %arg0, %c0_i32, %arg1 : i32, i32, i32
  }
  func.func @transform_1(%arg0: i32, %arg1: i32) -> (i32, i32) {
    %c0_i32 = arith.constant 0 : i32
    %c0_i32_0 = arith.constant 0 : i32
    %c0_i32_1 = arith.constant 0 : i32
    return %c0_i32, %c0_i32_0 : i32, i32
  }
  func.func @transform_2(%arg0: i32, %arg1: i32) -> (i32, i32) {
    %c0_i32 = arith.constant 0 : i32
    %c0_i32_0 = arith.constant 0 : i32
    %c0_i32_1 = arith.constant 0 : i32
    return %c0_i32, %c0_i32_0 : i32, i32
  }
  func.func @transform_3(%arg0: i32, %arg1: i32) -> (i32, i32, i32) {
    %c0_i32 = arith.constant 0 : i32
    %c0_i32_0 = arith.constant 0 : i32
    return %arg0, %c0_i32, %arg1 : i32, i32, i32
  }
}

</mosaic_0001>

<llo_original>
// kernel: tpu_custom_call.1
$region0: #{tpu_custom_call.1}
  #allocation0 [shape = 'u32[]', space=smem, size = 0x4, offset = 0x4, fixed_abs, tag = 'smem constant byte address 0x4 - core index']
  #allocation1 [shape = 'u32[144,128]{1,0:T(1,128)}', space=vmem, size = 0x12000, scoped, tag = 'internal scratch']
  %s0 = inlined_call_operand.hbm [shape: f32[2,4,256], index: 0, kind: input, shape index: {}]
  %s1 = inlined_call_operand.vmem [shape: f32[4,4], index: 1, kind: input, shape index: {}]
  %s2 = inlined_call_operand.vmem [shape: f32[4,1], index: 2, kind: input, shape index: {}]
  %s3 = inlined_call_operand.hbm [shape: f32[2,4,256], index: 3, kind: output, shape index: {}]
  %s4 = sld [smem:[#allocation0]]
  $region49: #{tpu_custom_call.1} parent=0
    _
  %s6 = ssub.s32 1, %s4
  %s7 = scalar_select 0, %s6, %s4
  $region1: #{tpu_custom_call.1} parent=0
    #allocation2 [shape = 'u8[8192]{0}', space=vmem, size = 0x2000, scoped, tag = 'input window, operand 0']
    #allocation3 [shape = 's32[2]{0}', space=sflag, size = 0x8, scoped, tag = 'scoped memory for tpu_custom_call.1']
    #allocation4 [shape = 's32[2]{0}', space=sflag, size = 0x8, scoped, tag = 'scoped memory for tpu_custom_call.1']
    #allocation5 [shape = 'u8[8192]{0}', space=vmem, size = 0x2000, scoped, tag = 'output window, operand 0']
    %8 = vsyncpa [#allocation3], 0
    %s9 = scalar_lea.sflag [#allocation3], 1
    %10 = vsyncpa %s9, 0
    %11 = vsyncpa [#allocation4], 0
    %s12 = scalar_lea.sflag [#allocation4], 1
    %13 = vsyncpa %s12, 0
    loop: start=0, step=1, limit=4
    $region2: #{tpu_custom_call.1} parent=1 // loop_pre_header
      _
    $region3: #{tpu_custom_call.1} parent=1 // loop_header
      %s15 = sphi 0, %s19
      %p16 = scmp.ge.s32.totalorder %s15, 4
      %s22 = sphi 0, %s34
      %s23 = sphi 0, %s30
      %s24 = sphi 0, %s22
      %s25 = sphi 0, %s23
      %s26 = sphi 0, %s24
      %s27 = sphi 0, %s25
      %s39 = sphi 0, %s41
      %s42 = sphi 0, %s39
      %s43 = sphi 0, %s42
      %s59 = sphi 0, %s43
      %s63 = sphi 0, %s63
      %s65 = sphi 0, %s63
      %s66 = sphi 0, %s65
      %s80 = sphi 0, %s66
      %s84 = sphi 0, %s84
      %s86 = sphi 0, %s84
      %s87 = sphi 0, %s86
      %s101 = sphi 0, %s87
      %s109 = sphi 0, %s111
      %s112 = sphi 0, %s109
      %s113 = sphi 0, %s112
      %s129 = sphi 0, %s113
    $region4: #{tpu_custom_call.1} parent=1 // loop_header_branch
      %18 = sbr.rel (%p16) target = $region8
    $region5: #{tpu_custom_call.1} parent=1 // loop_body
      %s20 = ssub.s32 %s15, 1
      %s21 = ssub.s32 %s15, 2
      %s28 = sadd.s32 1, %s23
      %p29 = scmp.ge.s32.totalorder %s28, 1
      %s30 = scalar_select %p29, 0, %s28
      %s31 = sadd.s32 1, %s22
      %s32 = scalar_select %p29, %s31, %s22
      %p33 = scmp.ge.s32.totalorder %s32, 2
      %s34 = scalar_select %p33, 0, %s32
      %s35 = ssub.s32 %s22, %s34
      %s36 = ssub.s32 %s23, %s30
      %s37 = sor.u32 %s35, %s36
      %p38 = scmp.eq.s32.totalorder %s37, 0
      %s40 = sadd.s32 %s39, 1
      %s41 = scalar_select %p38, %s39, %s40
      %p44 = pneg %p38
      %p45 = scmp.eq.s32.totalorder %s15, 1
      %p46 = por %p44, %p45
      %p47 = scmp.ne.s32.totalorder %s39, %s42
      %p48 = scmp.eq.s32.totalorder %s15, 0
      %p49 = por %p47, %p48
      %p50 = scmp.ne.s32.totalorder %s39, %s42
      %p51 = scmp.eq.s32.totalorder %s20, 1
      %p52 = por %p50, %p51
      %p53 = scmp.ne.s32.totalorder %s42, %s43
      %p54 = scmp.eq.s32.totalorder %s20, 0
      %p55 = por %p53, %p54
      %p56 = scmp.ne.s32.totalorder %s42, %s43
      %p57 = scmp.eq.s32.totalorder %s21, 1
      %p58 = por %p56, %p57
      %p60 = scmp.ne.s32.totalorder %s43, %s59
      %p61 = scmp.eq.s32.totalorder %s21, 0
      %p62 = por %p60, %p61
      %s64 = sadd.s32 %s63, 1
      %p67 = scmp.eq.s32.totalorder %s15, 1
      %p68 = scmp.ne.s32.totalorder %s63, %s65
      %p69 = scmp.eq.s32.totalorder %s15, 0
      %p70 = por %p68, %p69
      %p71 = scmp.ne.s32.totalorder %s63, %s65
      %p72 = scmp.eq.s32.totalorder %s20, 1
      %p73 = por %p71, %p72
      %p74 = scmp.ne.s32.totalorder %s65, %s66
      %p75 = scmp.eq.s32.totalorder %s20, 0
      %p76 = por %p74, %p75
      %p77 = scmp.ne.s32.totalorder %s65, %s66
      %p78 = scmp.eq.s32.totalorder %s21, 1
      %p79 = por %p77, %p78
      %p81 = scmp.ne.s32.totalorder %s66, %s80
      %p82 = scmp.eq.s32.totalorder %s21, 0
      %p83 = por %p81, %p82
      %s85 = sadd.s32 %s84, 1
      %p88 = scmp.eq.s32.totalorder %s15, 1
      %p89 = scmp.ne.s32.totalorder %s84, %s86
      %p90 = scmp.eq.s32.totalorder %s15, 0
      %p91 = por %p89, %p90
      %p92 = scmp.ne.s32.totalorder %s84, %s86
      %p93 = scmp.eq.s32.totalorder %s20, 1
      %p94 = por %p92, %p93
      %p95 = scmp.ne.s32.totalorder %s86, %s87
      %p96 = scmp.eq.s32.totalorder %s20, 0
      %p97 = por %p95, %p96
      %p98 = scmp.ne.s32.totalorder %s86, %s87
      %p99 = scmp.eq.s32.totalorder %s21, 1
      %p100 = por %p98, %p99
      %p102 = scmp.ne.s32.totalorder %s87, %s101
      %p103 = scmp.eq.s32.totalorder %s21, 0
      %p104 = por %p102, %p103
      %s105 = ssub.s32 %s22, %s34
      %s106 = ssub.s32 %s23, %s30
      %s107 = sor.u32 %s105, %s106
      %p108 = scmp.eq.s32.totalorder %s107, 0
      %s110 = sadd.s32 %s109, 1
      %s111 = scalar_select %p108, %s109, %s110
      %p114 = pneg %p108
      %p115 = scmp.eq.s32.totalorder %s15, 1
      %p116 = por %p114, %p115
      %p117 = scmp.ne.s32.totalorder %s109, %s112
      %p118 = scmp.eq.s32.totalorder %s15, 0
      %p119 = por %p117, %p118
      %p120 = scmp.ne.s32.totalorder %s109, %s112
      %p121 = scmp.eq.s32.totalorder %s20, 1
      %p122 = por %p120, %p121
      %p123 = scmp.ne.s32.totalorder %s112, %s113
      %p124 = scmp.eq.s32.totalorder %s20, 0
      %p125 = por %p123, %p124
      %p126 = scmp.ne.s32.totalorder %s112, %s113
      %p127 = scmp.eq.s32.totalorder %s21, 1
      %p128 = por %p126, %p127
      %p130 = scmp.ne.s32.totalorder %s113, %s129
      %p131 = scmp.eq.s32.totalorder %s21, 0
      %p132 = por %p130, %p131
      %p133 = scmp.le.s32.totalorder 1, %s15
      %p134 = scmp.lt.s32.totalorder %s15, 3
      %p135 = pnand %p133, %p134
      %p136 = pneg %p135
      // Predicated region
      $region9: #{tpu_custom_call.1} parent=5 // pred_check
        _
      $region10: #{tpu_custom_call.1} parent=5 // pred_check_branch
        %138 = sbr.rel (%p135) target = $region12
      $region11: #{tpu_custom_call.1} parent=5 // pred_region
        %s139 = ssub.s32 %s15, 1
        // Predicated region
        $region13: #{tpu_custom_call.1} parent=11 // pred_check
          %p140 = pneg %p76
        $region14: #{tpu_custom_call.1} parent=11 // pred_check_branch
          %142 = sbr.rel (%p140) target = $region16
        $region15: #{tpu_custom_call.1} parent=11 // pred_region
          _
        $region16: #{tpu_custom_call.1} parent=11 // pred_fallthru
          _
        // Predicated region
        $region17: #{tpu_custom_call.1} parent=11 // pred_check
          %p143 = pneg %p97
        $region18: #{tpu_custom_call.1} parent=11 // pred_check_branch
          %145 = sbr.rel (%p143) target = $region20
        $region19: #{tpu_custom_call.1} parent=11 // pred_region
          _
        $region20: #{tpu_custom_call.1} parent=11 // pred_fallthru
          _
      $region12: #{tpu_custom_call.1} parent=5 // pred_fallthru
        _
      %p146 = scmp.lt.s32.totalorder %s15, 2
      // Predicated region
      $region21: #{tpu_custom_call.1} parent=5 // pred_check
        %p147 = pneg %p146
      $region22: #{tpu_custom_call.1} parent=5 // pred_check_branch
        %149 = sbr.rel (%p147) target = $region24
      $region23: #{tpu_custom_call.1} parent=5 // pred_region
        // Predicated region
        $region25: #{tpu_custom_call.1} parent=23 // pred_check
          %p150 = pneg %p49
        $region26: #{tpu_custom_call.1} parent=23 // pred_check_branch
          %152 = sbr.rel (%p150) target = $region28
        $region27: #{tpu_custom_call.1} parent=23 // pred_region
          %s153 = sand.u32 %s39, 1
          %s154 = scalar_lea.sflag [#allocation3], %s153
          %s155 = sand.u32 %s39, 1
          %s156 = smul.addr %s155, 8
          %s157 = scalar_lea.vmem [#allocation2], %s156
          %s158 = smul.u32 2, %s23
          %s160 = ssub.s32 128, 128
          %161 = vsyncadd %s154, %s160
          %s162 = smul.addr %s22, 2
          %s163 = sadd.s32 %s158, %s162
          %s164 = smul.addr %s163, 64
          %s165 = scalar_lea.hbm %s0, %s164
          %s167 = sshll.u32 %s157, 4
          %s168 = int_to_ptr.vmem [resolvable:$true] %s167
          %170 = dma.hbm_to_vmem [thread:$0]  %s165, 128, %s168, %s154
        $region28: #{tpu_custom_call.1} parent=23 // pred_fallthru
          _
      $region24: #{tpu_custom_call.1} parent=5 // pred_fallthru
        _
      %p171 = scmp.le.s32.totalorder 1, %s15
      %p172 = scmp.lt.s32.totalorder %s15, 3
      %p173 = pnand %p171, %p172
      %p174 = pneg %p173
      // Predicated region
      $region29: #{tpu_custom_call.1} parent=5 // pred_check
        _
      $region30: #{tpu_custom_call.1} parent=5 // pred_check_branch
        %176 = sbr.rel (%p173) target = $region32
      $region31: #{tpu_custom_call.1} parent=5 // pred_region
        %s177 = ssub.s32 %s15, 1
        %s178 = sand.u32 %s42, 1
        %s179 = scalar_lea.sflag [#allocation3], %s178
        %s180 = sand.u32 %s42, 1
        %s181 = smul.addr %s180, 8
        %s182 = scalar_lea.vmem [#allocation2], %s181
        // Predicated region
        $region33: #{tpu_custom_call.1} parent=31 // pred_check
          %p183 = pneg %p55
        $region34: #{tpu_custom_call.1} parent=31 // pred_check_branch
          %185 = sbr.rel (%p183) target = $region36
        $region35: #{tpu_custom_call.1} parent=31 // pred_region
          %186 = dma.done %s179, 128
        $region36: #{tpu_custom_call.1} parent=31 // pred_fallthru
          _
        %s187 = sand.u32 %s42, 1
        %s188 = scalar_lea.sflag [#allocation3], %s187
        %s189 = sand.u32 %s42, 1
        %s190 = smul.addr %s189, 8
        %s191 = scalar_lea.vmem [#allocation2], %s190
        %p192 = pneg %p55
        %p193 = pneg %p52
        %p194 = pneg %p76
        %p195 = pneg %p73
        %p196 = pneg %p97
        %p197 = pneg %p94
        %p198 = pneg %p125
        %p199 = pneg %p122
        %s200 = sand.u32 %s112, 1
        %s201 = scalar_lea.sflag [#allocation4], %s200
        %s202 = sand.u32 %s112, 1
        %s203 = smul.addr %s202, 8
        %s204 = scalar_lea.vmem [#allocation5], %s203
        %s205 = smul.u32 2, %s25
        %s206 = smul.u32 2, %s25
        %v207 = vld [vmem:[%s182] sm:$0xff]
        %v208 = vld [vmem:[%s2] sm:$0xf]
        %v209 = vld [vmem:[%s1] sm:$0xf]
        %211 = vset.pattern.permute.xlu0 0
        %212 = vperm.xlu0 %211, %v208
        %v213 = vpop.permute.xlu0 %212
        %v215 = vunpack.c.l.s4 839922192
        %v216 = vunpack.c.0.s8 %v215
        %v217 = vlaneseq
        %v218 = vshrl.u32 %v217, 7
        %v219 = vsub.s32 %v216, %v218
        %v220 = vrot.slane %v213, %v219
        %v222 = vadd.f32 %v207, %v220
        %224 = vset.pattern.permute.xlu0 0
        %225 = vperm.xlu0 %224, %v209
        %v226 = vpop.permute.xlu0 %225
        %v229 = vlaneseq
        %v230 = vshrl.u32 %v229, 7
        %v231 = vsub.s32 0, %v230
        %v232 = vrot.slane %v207, %v231
        %v233 = vlaneseq
        %v234 = vshrl.u32 %v233, 7
        %v235 = vsub.s32 4, %v234
        %v236 = vrot.slane %v207, %v235
        %v239 = vlaneseq
        %v240 = vshrl.u32 %v239, 7
        %v241 = vsub.s32 0, %v240
        %v242 = vrot.slane %v232, %v241
        %v243 = vlaneseq
        %v244 = vshrl.u32 %v243, 7
        %v245 = vsub.s32 0, %v244
        %v246 = vrot.slane %v236, %v245
        %v247 = vmul.f32 %v226, %v242
        %v248 = vmul.f32 %v226, %v246
        %v251 = vcombine.low %v247, %v248
        %v253 = vadd.f32 %v222, %v251
        %254 = vset.pattern.permute.xlu0 1
        %255 = vperm.xlu0 %254, %v209
        %v256 = vpop.permute.xlu0 %255
        %v258 = vlaneseq
        %v259 = vshrl.u32 %v258, 7
        %v260 = vsub.s32 1, %v259
        %v261 = vrot.slane %v207, %v260
        %v262 = vlaneseq
        %v263 = vshrl.u32 %v262, 7
        %v264 = vsub.s32 5, %v263
        %v265 = vrot.slane %v207, %v264
        %v268 = vlaneseq
        %v269 = vshrl.u32 %v268, 7
        %v270 = vsub.s32 1, %v269
        %v271 = vrot.slane %v261, %v270
        %v272 = vlaneseq
        %v273 = vshrl.u32 %v272, 7
        %v274 = vsub.s32 1, %v273
        %v275 = vrot.slane %v265, %v274
        %v276 = vmul.f32 %v256, %v271
        %v277 = vmul.f32 %v256, %v275
        %v280 = vcombine.low %v276, %v277
        %v282 = vadd.f32 %v253, %v280
        %283 = vset.pattern.permute.xlu0 2
        %284 = vperm.xlu0 %283, %v209
        %v285 = vpop.permute.xlu0 %284
        %v287 = vlaneseq
        %v288 = vshrl.u32 %v287, 7
        %v289 = vsub.s32 2, %v288
        %v290 = vrot.slane %v207, %v289
        %v291 = vlaneseq
        %v292 = vshrl.u32 %v291, 7
        %v293 = vsub.s32 6, %v292
        %v294 = vrot.slane %v207, %v293
        %v297 = vlaneseq
        %v298 = vshrl.u32 %v297, 7
        %v299 = vsub.s32 2, %v298
        %v300 = vrot.slane %v290, %v299
        %v301 = vlaneseq
        %v302 = vshrl.u32 %v301, 7
        %v303 = vsub.s32 2, %v302
        %v304 = vrot.slane %v294, %v303
        %v305 = vmul.f32 %v285, %v300
        %v306 = vmul.f32 %v285, %v304
        %v309 = vcombine.low %v305, %v306
        %v311 = vadd.f32 %v282, %v309
        %312 = vset.pattern.permute.xlu0 3
        %313 = vperm.xlu0 %312, %v209
        %v314 = vpop.permute.xlu0 %313
        %v316 = vlaneseq
        %v317 = vshrl.u32 %v316, 7
        %v318 = vsub.s32 3, %v317
        %v319 = vrot.slane %v207, %v318
        %v320 = vlaneseq
        %v321 = vshrl.u32 %v320, 7
        %v322 = vsub.s32 7, %v321
        %v323 = vrot.slane %v207, %v322
        %v326 = vlaneseq
        %v327 = vshrl.u32 %v326, 7
        %v328 = vsub.s32 3, %v327
        %v329 = vrot.slane %v319, %v328
        %v330 = vlaneseq
        %v331 = vshrl.u32 %v330, 7
        %v332 = vsub.s32 3, %v331
        %v333 = vrot.slane %v323, %v332
        %v334 = vmul.f32 %v314, %v329
        %v335 = vmul.f32 %v314, %v333
        %v338 = vcombine.low %v334, %v335
        %v340 = vadd.f32 %v311, %v338
        %341 = vst [vmem:[%s204] sm:$0xff] %v340
        %s342 = sand.u32 %s112, 1
        %s343 = scalar_lea.sflag [#allocation4], %s342
        %s344 = sand.u32 %s112, 1
        %s345 = smul.addr %s344, 8
        %s346 = scalar_lea.vmem [#allocation5], %s345
        // Predicated region
        $region37: #{tpu_custom_call.1} parent=31 // pred_check
          %p347 = pneg %p122
        $region38: #{tpu_custom_call.1} parent=31 // pred_check_branch
          %349 = sbr.rel (%p347) target = $region40
        $region39: #{tpu_custom_call.1} parent=31 // pred_region
          %s350 = smul.u32 2, %s25
          %s352 = ssub.s32 128, 128
          %353 = vsyncadd %s343, %s352
          %s354 = smul.addr %s24, 2
          %s355 = sadd.s32 %s350, %s354
          %s356 = smul.addr %s355, 64
          %s357 = scalar_lea.hbm %s3, %s356
          %s359 = sshll.u32 %s346, 4
          %s360 = int_to_ptr.vmem [resolvable:$true] %s359
          %362 = dma.vmem_to_hbm [thread:$0]  %s360, 128, %s357, %s343
        $region40: #{tpu_custom_call.1} parent=31 // pred_fallthru
          _
      $region32: #{tpu_custom_call.1} parent=5 // pred_fallthru
        _
      %p363 = scmp.le.s32.totalorder 2, %s15
      // Predicated region
      $region41: #{tpu_custom_call.1} parent=5 // pred_check
        %p364 = pneg %p363
      $region42: #{tpu_custom_call.1} parent=5 // pred_check_branch
        %366 = sbr.rel (%p364) target = $region44
      $region43: #{tpu_custom_call.1} parent=5 // pred_region
        %s367 = ssub.s32 %s15, 2
        // Predicated region
        $region45: #{tpu_custom_call.1} parent=43 // pred_check
          %p368 = pneg %p128
        $region46: #{tpu_custom_call.1} parent=43 // pred_check_branch
          %370 = sbr.rel (%p368) target = $region48
        $region47: #{tpu_custom_call.1} parent=43 // pred_region
          %s371 = sand.u32 %s113, 1
          %s372 = scalar_lea.sflag [#allocation4], %s371
          %s373 = sand.u32 %s113, 1
          %s374 = smul.addr %s373, 8
          %s375 = scalar_lea.vmem [#allocation5], %s374
          %376 = dma.done %s372, 128
        $region48: #{tpu_custom_call.1} parent=43 // pred_fallthru
          _
      $region44: #{tpu_custom_call.1} parent=5 // pred_fallthru
        _
    $region6: #{tpu_custom_call.1} parent=1 // loop_footer
      %s19 = sadd.s32 1, %s15
    $region7: #{tpu_custom_call.1} parent=1 // loop_footer_branch
      %14 = sbr.rel target = $region3
    $region8: #{tpu_custom_call.1} parent=1 // loop_exit
      _
    %377 = vsyncpa [#allocation3], 1
    %s378 = scalar_lea.sflag [#allocation3], 1
    %379 = vsyncpa %s378, 1
    %380 = vsyncpa [#allocation4], 1
    %s381 = scalar_lea.sflag [#allocation4], 1
    %382 = vsyncpa %s381, 1

</llo_original>
